<compile_context>
chip_gen: v5e
topology: v5e:2x2
jax: 0.10.0
libtpu: 0.0.40
codegen_flags: <defaults>
</compile_context>

<pallas_src>
import functools

import jax
import jax.numpy as jnp
import numpy as np
from jax.experimental import pallas as pl
from jax.experimental.pallas import tpu as pltpu


def _device_kind():
    try:
        return jax.devices()[0].device_kind.lower()
    except Exception:
        return ""


def _num_tensorcores():
    # 2 TensorCores per chip only on v7x; v5e/v6e are single-TC, and faking a
    # 2-way split there just inflates padding / caps the tile size.
    return 2 if "v7" in _device_kind() else 1


def _vmem_capacity_bytes():
    try:
        cap = int(pltpu.get_tpu_info().vmem_capacity_bytes)
        cap = max(16 << 20, min(cap, 128 << 20))
    except Exception:
        cap = 64 << 20  # conservative fallback
    if "v7" in _device_kind():
        cap = min(cap, 64 << 20)  # v7x: 64 MiB per TensorCore is the hard cap
    return cap


def _choose_row_tile(rows, cols, itemsize, ncores, vmem_limit_bytes):
    """Row tile (multiple of 8) and step count sized from the VMEM budget."""
    # Fixed residents: (8, cols) f32 accumulator block (x2 for output
    # buffering) plus a little slack for Mosaic internals.
    fixed = 2 * 8 * cols * 4 + (2 << 20)
    budget = max(vmem_limit_bytes - fixed, 1 << 20)
    # Per tile row: 2 inputs x 2 pipeline buffers (native dtype) and ~4 f32
    # tile-sized temporaries live at once in the elementwise chain (the chain
    # reuses buffers; re-verify on v7x's 64 MiB if this is ever raised).
    per_row = cols * (2 * 2 * itemsize + 4 * 4)
    tm_cap = max(8, min(4096, (budget // max(per_row, 1)) // 8 * 8))

    rows_per_core = -(-rows // ncores)
    steps = -(-rows_per_core // tm_cap)
    # Balance the tile across steps so the padded extent overshoots `rows` by
    # at most ~8 rows per core (instead of up to tm-8 with tm = tm_cap).
    per_step = -(-rows_per_core // steps)
    tm = -(-per_step // 8) * 8
    return tm, steps


def _cwd_kl_kernel(s_ref, t_ref, out_ref, *, inv_temp, rows, tm, steps,
                   need_mask):
    """Accumulate t_prob * (log t_prob - log_softmax(s)) into an (8, cols) slab."""
    c = pl.program_id(0)
    i = pl.program_id(1)

    @pl.when(i == 0)
    def _():
        out_ref[...] = jnp.zeros_like(out_ref)

    # Widening multiply folds a possible sub-f32 -> f32 upcast into the 1/T
    # scaling (one VPU op per tensor instead of cast + mul).
    inv_t = jnp.float32(inv_temp)
    s = s_ref[...] * inv_t
    t = t_ref[...] * inv_t

    # Student: keep only the shifted logits and the per-row log-sum-exp.
    s_shift = s - jnp.max(s, axis=-1, keepdims=True)
    s_lse = jnp.log(jnp.sum(jnp.exp(s_shift), axis=-1, keepdims=True))

    # Teacher softmax.
    t_shift = t - jnp.max(t, axis=-1, keepdims=True)
    t_exp = jnp.exp(t_shift)
    t_sum = jnp.sum(t_exp, axis=-1, keepdims=True)
    # Exact reciprocal: approx=True (~2^-12 rel err) is borderline vs the
    # 1e-4 self-check tolerance.
    t_prob = t_exp * pl.reciprocal(t_sum)

    # Fused log-prob algebra (no s_logp / t_logp materialization):
    #   log t_prob - log_softmax(s) = (t_shift - s_shift) + (s_lse - log t_sum)
    kl = t_prob * ((t_shift - s_shift) + (s_lse - jnp.log(t_sum)))

    if need_mask:
        # A partial last tile extends past the true row count; its contents
        # are unspecified, so select-to-zero keeps the sum exact without any
        # host-side padding copy (and with no NaN/inf leakage: where is a
        # select, reductions above are strictly per-row).
        row0 = (c * steps + i) * tm
        row_ids = row0 + jax.lax.broadcasted_iota(jnp.int32, (tm, 1), 0)
        kl = jnp.where(row_ids < rows, kl, 0.0)

    # Fold sublane groups with pure VPU adds; no per-step cross-lane XLU
    # reduce and no scalar RMW chain.
    cols = kl.shape[-1]
    out_ref[...] += kl.reshape(tm // 8, 8, cols).sum(axis=0)


def _cwd_kl_sum(s2d, t2d, temp):
    """Sum over all rows of KL(softmax(t/T) || softmax(s/T)) via Pallas."""
    rows, cols = s2d.shape

    ncores = max(1, min(_num_tensorcores(), rows // 8))
    vmem_cap = _vmem_capacity_bytes()
    vmem_limit = (vmem_cap * 7) // 8  # ~112 MiB on v5e/v6e, ~56 MiB on v7x
    itemsize = jnp.dtype(s2d.dtype).itemsize
    tm, steps = _choose_row_tile(rows, cols, itemsize, ncores, vmem_limit)
    need_mask = (ncores * steps * tm) != rows

    kernel = functools.partial(
        _cwd_kl_kernel,
        inv_temp=1.0 / float(temp),
        rows=rows, tm=tm, steps=steps, need_mask=need_mask)

    # Only core_parallel changes codegen; plain "parallel" vs "arbitrary" is a
    # wash, and on 1-TC chips the leading axis is size-1 anyway.
    core_sem = pltpu.CORE_PARALLEL if ncores > 1 else "arbitrary"

    cost = pl.CostEstimate(
        flops=12 * rows * cols,
        transcendentals=2 * rows * cols,
        bytes_accessed=2 * rows * cols * itemsize + ncores * 8 * cols * 4)

    partials = pl.pallas_call(
        kernel,
        out_shape=jax.ShapeDtypeStruct((ncores * 8, cols), jnp.float32),
        grid_spec=pltpu.PrefetchScalarGridSpec(
            num_scalar_prefetch=0,
            grid=(ncores, steps),
            in_specs=[
                # Lane dim is the full array extent (valid even when H*W is
                # not a multiple of 128), so no host-side lane padding.
                pl.BlockSpec((tm, cols), lambda c, i: (c * steps + i, 0)),
                pl.BlockSpec((tm, cols), lambda c, i: (c * steps + i, 0)),
            ],
            # Lane-dense per-core partial accumulator, resident across the
            # inner (reduction) axis; distinct block per core.
            out_specs=pl.BlockSpec((8, cols), lambda c, i: (c, 0)),
        ),
        compiler_params=pltpu.CompilerParams(
            dimension_semantics=(core_sem, "arbitrary"),
            vmem_limit_bytes=int(vmem_limit),
        ),
        cost_estimate=cost,
    )(s2d, t2d)
    # Final cross-lane reduce of the tiny partial slab happens in plain JAX.
    return jnp.sum(partials)


def cwd_loss(s_feats, t_feats, temp=4.0):
    """JAX/Pallas equivalent of CWDLoss.forward."""
    # NOTE: per-map pallas_calls (a few us launch overhead each) are kept
    # rather than concatenating same-H*W maps: jnp.concatenate would add a
    # full extra HBM pass over both tensors, which is what we just removed.
    total = jnp.float32(0.0)
    for s, t in zip(s_feats, t_feats):
        if s.shape[-2:] != t.shape[-2:]:
            # TODO(synk): bilinear resize of the teacher map is plain-JAX glue
            # (jax.image.resize 'bilinear' matches F.interpolate
            # align_corners=False for upsampling; it antialiases on
            # downsampling, which PyTorch's default does not).
            t = jax.image.resize(t, t.shape[:2] + s.shape[-2:], method="bilinear")
        n, c, h, w = s.shape
        # Contiguous reshape (no copy); feed native dtype (e.g. bf16) so the
        # kernel's widening 1/T multiply does the upcast — never insert a
        # standalone astype pass here.
        s2 = s.reshape(n * c, h * w)
        t2 = t.reshape(n * c, h * w)
        kl_sum = _cwd_kl_sum(s2, t2, temp)
        # F.kl_div(reduction='batchmean') on the (N, C, H*W) input divides by
        # its first dim N — matching this module's PyTorch source (the
        # mmrazor variant divides by N*C; not what is specified here).
        total = total + kl_sum / n * (temp ** 2)
    return total / len(s_feats)


def _reference(s_feats, t_feats, temp=4.0):
    total = 0.0
    for s, t in zip(s_feats, t_feats):
        if s.shape[-2:] != t.shape[-2:]:
            t = jax.image.resize(t, t.shape[:2] + s.shape[-2:], method="bilinear")
        n = s.shape[0]
        s2 = (s.reshape(s.shape[0] * s.shape[1], -1) / temp).astype(jnp.float32)
        t2 = (t.reshape(t.shape[0] * t.shape[1], -1) / temp).astype(jnp.float32)
        s_logp = jax.nn.log_softmax(s2, axis=-1)
        t_prob = jax.nn.softmax(t2, axis=-1)
        t_logp = jax.nn.log_softmax(t2, axis=-1)
        kl = jnp.sum(t_prob * (t_logp - s_logp))
        total = total + kl / n * (temp ** 2)
    return total / len(s_feats)


if __name__ == "__main__":
    key = jax.random.PRNGKey(0)
    k1, k2, k3, k4, k5, k6 = jax.random.split(key, 6)

    # Three feature-map pairs; the last one has mismatched spatial dims to
    # exercise the bilinear-resize path of the module.
    s_feats = [
        jax.random.normal(k1, (2, 4, 16, 16), dtype=jnp.float32),
        jax.random.normal(k2, (2, 8, 8, 16), dtype=jnp.float32),
        jax.random.normal(k5, (2, 4, 16, 16), dtype=jnp.float32),
    ]
    t_feats = [
        jax.random.normal(k3, (2, 4, 16, 16), dtype=jnp.float32),
        jax.random.normal(k4, (2, 8, 8, 16), dtype=jnp.float32),
        jax.random.normal(k6, (2, 4, 8, 8), dtype=jnp.float32),
    ]

    loss = cwd_loss(s_feats, t_feats, temp=4.0)
    loss = jax.block_until_ready(loss)

    ref = _reference(s_feats, t_feats, temp=4.0)
    np.testing.assert_allclose(np.array(loss), np.array(ref), rtol=1e-4, atol=1e-5)

    print("KERNEL_OK")
</pallas_src>

<mosaic_0001>
module attributes {stable_mosaic.version = 11 : i64} {
  func.func @_cwd_kl_kernel(%arg0: i32, %arg1: i32, %arg2: memref<8x256xf32, #tpu.memory_space<vmem>>, %arg3: memref<8x256xf32, #tpu.memory_space<vmem>>, %arg4: memref<8x256xf32, #tpu.memory_space<vmem>>) attributes {dimension_semantics = [#tpu.dimension_semantics<arbitrary>, #tpu.dimension_semantics<arbitrary>], iteration_bounds = array<i64: 1, 1>, scalar_prefetch = 0 : i64, scratch_operands = 0 : i64, tpu.core_type = #tpu.core_type<tc>, window_params = [{transform_indices = @transform_0, window_bounds = array<i64: 8, 256>}, {transform_indices = @transform_1, window_bounds = array<i64: 8, 256>}, {transform_indices = @transform_2, window_bounds = array<i64: 8, 256>}]} {
    %c0_i32 = arith.constant 0 : i32
    %0 = arith.cmpi eq, %arg1, %c0_i32 : i32
    %1 = arith.extui %0 : i1 to i32
    %c0_i32_0 = arith.constant 0 : i32
    %2 = arith.cmpi ne, %1, %c0_i32_0 : i32
    scf.if %2 {
      %cst_14 = arith.constant 0.000000e+00 : f32
      %38 = vector.broadcast %cst_14 : f32 to vector<8x256xf32>
      %c0_15 = arith.constant 0 : index
      %c0_16 = arith.constant 0 : index
      %39 = vector.load %arg4[%c0_15, %c0_16] : memref<8x256xf32, #tpu.memory_space<vmem>>, vector<8x256xf32>
      tpu.vector_store %arg4[%c0_15, %c0_16], %38 {strides = array<i32>} : memref<8x256xf32, #tpu.memory_space<vmem>>, vector<8x256xf32>,
    } else {
    }
    %c0 = arith.constant 0 : index
    %c0_1 = arith.constant 0 : index
    %3 = vector.load %arg2[%c0, %c0_1] : memref<8x256xf32, #tpu.memory_space<vmem>>, vector<8x256xf32>
    %cst = arith.constant 2.500000e-01 : f32
    %4 = vector.broadcast %cst : f32 to vector<8x256xf32>
    %5 = arith.mulf %3, %4 : vector<8x256xf32>
    %c0_2 = arith.constant 0 : index
    %c0_3 = arith.constant 0 : index
    %6 = vector.load %arg3[%c0_2, %c0_3] : memref<8x256xf32, #tpu.memory_space<vmem>>, vector<8x256xf32>
    %cst_4 = arith.constant 2.500000e-01 : f32
    %7 = vector.broadcast %cst_4 : f32 to vector<8x256xf32>
    %8 = arith.mulf %6, %7 : vector<8x256xf32>
    %cst_5 = arith.constant dense<0xFF800000> : vector<8xf32>
    %9 = vector.multi_reduction <maximumf>, %5, %cst_5 [1] : vector<8x256xf32> to vector<8xf32>
    %10 = vector.shape_cast %9 : vector<8xf32> to vector<8x1xf32>
    %11 = vector.broadcast %10 : vector<8x1xf32> to vector<8x256xf32>
    %12 = arith.subf %5, %11 : vector<8x256xf32>
    %13 = math.exp %12 : vector<8x256xf32>
    %cst_6 = arith.constant dense<0.000000e+00> : vector<8xf32>
    %14 = vector.multi_reduction <add>, %13, %cst_6 [1] : vector<8x256xf32> to vector<8xf32>
    %15 = vector.shape_cast %14 : vector<8xf32> to vector<8x1xf32>
    %16 = math.log %15 : vector<8x1xf32>
    %cst_7 = arith.constant dense<0xFF800000> : vector<8xf32>
    %17 = vector.multi_reduction <maximumf>, %8, %cst_7 [1] : vector<8x256xf32> to vector<8xf32>
    %18 = vector.shape_cast %17 : vector<8xf32> to vector<8x1xf32>
    %19 = vector.broadcast %18 : vector<8x1xf32> to vector<8x256xf32>
    %20 = arith.subf %8, %19 : vector<8x256xf32>
    %21 = math.exp %20 : vector<8x256xf32>
    %cst_8 = arith.constant dense<0.000000e+00> : vector<8xf32>
    %22 = vector.multi_reduction <add>, %21, %cst_8 [1] : vector<8x256xf32> to vector<8xf32>
    %23 = vector.shape_cast %22 : vector<8xf32> to vector<8x1xf32>
    %24 = tpu.reciprocal %23 : vector<8x1xf32> -> vector<8x1xf32>
    %25 = vector.broadcast %24 : vector<8x1xf32> to vector<8x256xf32>
    %26 = arith.mulf %21, %25 : vector<8x256xf32>
    %27 = arith.subf %20, %12 : vector<8x256xf32>
    %28 = math.log %23 : vector<8x1xf32>
    %29 = arith.subf %16, %28 : vector<8x1xf32>
    %30 = vector.broadcast %29 : vector<8x1xf32> to vector<8x256xf32>
    %31 = arith.addf %27, %30 : vector<8x256xf32>
    %32 = arith.mulf %26, %31 : vector<8x256xf32>
    %c0_9 = arith.constant 0 : index
    %c0_10 = arith.constant 0 : index
    %33 = vector.load %arg4[%c0_9, %c0_10] : memref<8x256xf32, #tpu.memory_space<vmem>>, vector<8x256xf32>
    %34 = vector.shape_cast %32 : vector<8x256xf32> to vector<1x8x256xf32>
    %cst_11 = arith.constant dense<0.000000e+00> : vector<8x256xf32>
    %35 = vector.multi_reduction <add>, %34, %cst_11 [0] : vector<1x8x256xf32> to vector<8x256xf32>
    %36 = arith.addf %33, %35 : vector<8x256xf32>
    %c0_12 = arith.constant 0 : index
    %c0_13 = arith.constant 0 : index
    %37 = vector.load %arg4[%c0_12, %c0_13] : memref<8x256xf32, #tpu.memory_space<vmem>>, vector<8x256xf32>
    tpu.vector_store %arg4[%c0_12, %c0_13], %36 {strides = array<i32>} : memref<8x256xf32, #tpu.memory_space<vmem>>, vector<8x256xf32>,
    return
  }
  func.func @transform_0(%arg0: i32, %arg1: i32) -> (i32, i32) {
    %c1_i32 = arith.constant 1 : i32
    %0 = arith.muli %arg0, %c1_i32 : i32
    %1 = arith.addi %0, %arg1 : i32
    %c0_i32 = arith.constant 0 : i32
    %c0_i32_0 = arith.constant 0 : i32
    return %1, %c0_i32 : i32, i32
  }
  func.func @transform_1(%arg0: i32, %arg1: i32) -> (i32, i32) {
    %c1_i32 = arith.constant 1 : i32
    %0 = arith.muli %arg0, %c1_i32 : i32
    %1 = arith.addi %0, %arg1 : i32
    %c0_i32 = arith.constant 0 : i32
    %c0_i32_0 = arith.constant 0 : i32
    return %1, %c0_i32 : i32, i32
  }
  func.func @transform_2(%arg0: i32, %arg1: i32) -> (i32, i32) {
    %c0_i32 = arith.constant 0 : i32
    %c0_i32_0 = arith.constant 0 : i32
    return %arg0, %c0_i32 : i32, i32
  }
}

</mosaic_0001>

<llo_original>
// kernel: tpu_custom_call.1
$region0: #{tpu_custom_call.1}
  #allocation0 [shape = 'u32[]', space=smem, size = 0x4, offset = 0x4, fixed_abs, tag = 'smem constant byte address 0x4 - core index']
  #allocation1 [shape = 'u32[72,128]{1,0:T(1,128)}', space=vmem, size = 0x9000, scoped, tag = 'internal scratch']
  %s0 = inlined_call_operand.hbm [shape: f32[8,256], index: 0, kind: input, shape index: {}]
  %s1 = inlined_call_operand.hbm [shape: f32[8,256], index: 1, kind: input, shape index: {}]
  %s2 = inlined_call_operand.hbm [shape: f32[8,256], index: 2, kind: output, shape index: {}]
  %s3 = sld [smem:[#allocation0]]
  $region30: #{tpu_custom_call.1} parent=0
    _
  %s5 = ssub.s32 1, %s3
  %s6 = scalar_select 0, %s5, %s3
  $region1: #{tpu_custom_call.1} parent=0
    #allocation2 [shape = 'u8[8192]{0}', space=vmem, size = 0x2000, scoped, tag = 'input window, operand 0, single buffered']
    #allocation3 [shape = 's32[1]{0}', space=sflag, size = 0x4, scoped, tag = 'scoped memory for tpu_custom_call.1']
    #allocation4 [shape = 's32[1]{0}', space=sflag, size = 0x4, scoped, tag = 'scoped memory for tpu_custom_call.1']
    #allocation5 [shape = 'u8[8192]{0}', space=vmem, size = 0x2000, scoped, tag = 'input window, operand 1, single buffered']
    #allocation6 [shape = 's32[1]{0}', space=sflag, size = 0x4, scoped, tag = 'scoped memory for tpu_custom_call.1']
    #allocation7 [shape = 'u8[8192]{0}', space=vmem, size = 0x2000, scoped, tag = 'output window, operand 0, single buffered']
    %7 = vsyncpa [#allocation3], 0
    %8 = vsyncpa [#allocation6], 0
    %9 = vsyncpa [#allocation4], 0
    // Predicated region
    $region2: #{tpu_custom_call.1} parent=1 // pred_check
      _
    $region3: #{tpu_custom_call.1} parent=1 // pred_check_branch
      %11 = sbr.rel (0) target = $region5
    $region4: #{tpu_custom_call.1} parent=1 // pred_region
      %s12 = sadd.s32 0, 0
      %14 = vsyncadd [#allocation3], 0
      %s15 = smul.addr %s12, 2
      %s16 = smul.addr %s15, 8
      %s17 = scalar_lea.hbm %s0, %s16
      %s19 = sshll.u32 %s17, 4
      %s20 = int_to_ptr.hbm [resolvable:$true] %s19
      %s21 = sshll.u32 [#allocation2], 4
      %s22 = int_to_ptr.vmem [resolvable:$true] %s21
      %24 = dma.hbm_to_vmem [thread:$0]  %s20, 256, %s22, [#allocation3]
    $region5: #{tpu_custom_call.1} parent=1 // pred_fallthru
      _
    // Predicated region
    $region6: #{tpu_custom_call.1} parent=1 // pred_check
      _
    $region7: #{tpu_custom_call.1} parent=1 // pred_check_branch
      %26 = sbr.rel (0) target = $region9
    $region8: #{tpu_custom_call.1} parent=1 // pred_region
      %s27 = sadd.s32 0, 0
      %29 = vsyncadd [#allocation6], 0
      %s30 = smul.addr %s27, 2
      %s31 = smul.addr %s30, 8
      %s32 = scalar_lea.hbm %s1, %s31
      %s34 = sshll.u32 %s32, 4
      %s35 = int_to_ptr.hbm [resolvable:$true] %s34
      %s36 = sshll.u32 [#allocation5], 4
      %s37 = int_to_ptr.vmem [resolvable:$true] %s36
      %39 = dma.hbm_to_vmem [thread:$0]  %s35, 256, %s37, [#allocation6]
    $region9: #{tpu_custom_call.1} parent=1 // pred_fallthru
      _
    // Predicated region
    $region10: #{tpu_custom_call.1} parent=1 // pred_check
      _
    $region11: #{tpu_custom_call.1} parent=1 // pred_check_branch
      %41 = sbr.rel (0) target = $region13
    $region12: #{tpu_custom_call.1} parent=1 // pred_region
      %43 = dma.done [#allocation3], 256
    $region13: #{tpu_custom_call.1} parent=1 // pred_fallthru
      _
    // Predicated region
    $region14: #{tpu_custom_call.1} parent=1 // pred_check
      _
    $region15: #{tpu_custom_call.1} parent=1 // pred_check_branch
      %45 = sbr.rel (0) target = $region17
    $region16: #{tpu_custom_call.1} parent=1 // pred_region
      %47 = dma.done [#allocation6], 256
    $region17: #{tpu_custom_call.1} parent=1 // pred_fallthru
      _
    %s48 = sadd.s32 0, 0
    %s49 = sadd.s32 0, 0
    %p50 = scmp.eq.s32.totalorder 0, 0
    // Predicated region
    $region18: #{tpu_custom_call.1} parent=1 // pred_check
      %p51 = pneg %p50
    $region19: #{tpu_custom_call.1} parent=1 // pred_check_branch
      %53 = sbr.rel (%p51) target = $region21
    $region20: #{tpu_custom_call.1} parent=1 // pred_region
      %54 = vst [vmem:[#allocation7] sm:$0xff] 0.0
      %55 = vst [vmem:[#allocation7 + $0x8] sm:$0xff] 0.0
    $region21: #{tpu_custom_call.1} parent=1 // pred_fallthru
      _
    %v56 = vld [vmem:[#allocation2] sm:$0xff]
    %v57 = vld [vmem:[#allocation2 + $0x8] sm:$0xff]
    %v58 = vmul.f32 %v56, 0.25
    %v59 = vmul.f32 %v57, 0.25
    %v60 = vld [vmem:[#allocation5] sm:$0xff]
    %v61 = vld [vmem:[#allocation5 + $0x8] sm:$0xff]
    %v62 = vmul.f32 %v60, 0.25
    %v63 = vmul.f32 %v61, 0.25
    %v64 = vmax.f32 %v58, %v59
    %65 = vmax.xlane.f32.xlu0 %v64
    %v66 = vpop.xlane.xlu0 %65
    %v67 = vsub.f32 %v58, %v66
    %v68 = vsub.f32 %v59, %v66
    %v69 = vmul.f32 %v67, 1.442695
    %v70 = vpow.pop %v69
    %v71 = vmul.f32 %v68, 1.442695
    %v72 = vpow.pop %v71
    %v73 = vadd.f32 %v70, %v72
    %74 = vadd.xlane.f32.xlu0 %v73
    %v75 = vpop.xlane.xlu0 %74
    %v76 = vlog2.pop %v75
    %v77 = vmul.f32 %v76, 0.6931472
    %v78 = vmax.f32 %v62, %v63
    %79 = vmax.xlane.f32.xlu0 %v78
    %v80 = vpop.xlane.xlu0 %79
    %v81 = vsub.f32 %v62, %v80
    %v82 = vsub.f32 %v63, %v80
    %v83 = vmul.f32 %v81, 1.442695
    %v84 = vpow.pop %v83
    %v85 = vmul.f32 %v82, 1.442695
    %v86 = vpow.pop %v85
    %v87 = vadd.f32 %v84, %v86
    %88 = vadd.xlane.f32.xlu0 %v87
    %v89 = vpop.xlane.xlu0 %88
    %v90 = vrcp.pop %v89
    %v91 = vmul.f32 %v89, %v90
    %v92 = vsub.f32 1.0, %v91
    %v93 = vmul.f32 %v90, %v92
    %v94 = vadd.f32 %v90, %v93
    %vm95 = vweird.f32 %v89
    %vm96 = vweird.f32 %v90
    %vm97 = vmor %vm95, %vm96
    %v98 = vsel %vm97, %v90, %v94
    %v99 = vand.u32 2147483647, %v89
    %vm100 = vcmp.eq.f32.partialorder %v99, 8.507059e+37
    %v101 = vand.u32 %v89, 2147483648
    %v102 = vor.u32 1.1754944e-38, %v101
    %v103 = vsel %vm100, %v102, %v98
    %v104 = vmul.f32 %v84, %v103
    %v105 = vmul.f32 %v86, %v103
    %v106 = vsub.f32 %v81, %v67
    %v107 = vsub.f32 %v82, %v68
    %v108 = vlog2.pop %v89
    %v109 = vmul.f32 %v108, 0.6931472
    %v110 = vsub.f32 %v77, %v109
    %v111 = vadd.f32 %v106, %v110
    %v112 = vadd.f32 %v107, %v110
    %v113 = vmul.f32 %v104, %v111
    %v114 = vmul.f32 %v105, %v112
    %v115 = vld [vmem:[#allocation7] sm:$0xff]
    %v116 = vld [vmem:[#allocation7 + $0x8] sm:$0xff]
    %v117 = vadd.f32 %v113, 0.0
    %v118 = vadd.f32 %v114, 0.0
    %v119 = vadd.f32 %v115, %v117
    %v120 = vadd.f32 %v116, %v118
    %121 = vst [vmem:[#allocation7] sm:$0xff] %v119
    %122 = vst [vmem:[#allocation7 + $0x8] sm:$0xff] %v120
    // Predicated region
    $region22: #{tpu_custom_call.1} parent=1 // pred_check
      _
    $region23: #{tpu_custom_call.1} parent=1 // pred_check_branch
      %124 = sbr.rel (0) target = $region25
    $region24: #{tpu_custom_call.1} parent=1 // pred_region
      %126 = vsyncadd [#allocation4], 0
      %s128 = sshll.u32 [#allocation7], 4
      %s129 = int_to_ptr.vmem [resolvable:$true] %s128
      %s130 = sshll.u32 %s2, 4
      %s131 = int_to_ptr.hbm [resolvable:$true] %s130
      %133 = dma.vmem_to_hbm [thread:$0]  %s129, 256, %s131, [#allocation4]
    $region25: #{tpu_custom_call.1} parent=1 // pred_fallthru
      _
    // Predicated region
    $region26: #{tpu_custom_call.1} parent=1 // pred_check
      _
    $region27: #{tpu_custom_call.1} parent=1 // pred_check_branch
      %135 = sbr.rel (0) target = $region29
    $region28: #{tpu_custom_call.1} parent=1 // pred_region
      %137 = dma.done [#allocation4], 256
    $region29: #{tpu_custom_call.1} parent=1 // pred_fallthru
      _
    %138 = vsyncpa [#allocation3], 1
    %139 = vsyncpa [#allocation6], 1
    %140 = vsyncpa [#allocation4], 1

</llo_original>
